<compile_context>
chip_gen: v7x
topology: tpu7x:2x2x1
jax: 0.10.0
libtpu: 0.0.40
codegen_flags: <defaults>
</compile_context>

<pallas_src>
import functools

import jax
import jax.numpy as jnp
from jax import lax
from jax.experimental import pallas as pl
from jax.experimental.pallas import tpu as pltpu


def _round_up(x, m):
    return ((x + m - 1) // m) * m


def _score_kernel_items_t(users_ref, items_t_ref, scores_ref):
    # users_ref: (tb, D), items_t_ref: (D, tn)  -> lane-dense RHS, standard MXU matmul.
    scores_ref[...] = jnp.dot(
        users_ref[...], items_t_ref[...], preferred_element_type=jnp.float32
    ).astype(scores_ref.dtype)


def _score_kernel_items_nt(users_ref, items_ref, scores_ref):
    # users_ref: (tb, D), items_ref: (tn, D); contract dim 1 of BOTH operands
    # so the MXU consumes the RHS transposed (no materialized .T, no XLU).
    scores_ref[...] = lax.dot_general(
        users_ref[...],
        items_ref[...],
        dimension_numbers=(((1,), (1,)), ((), ())),
        preferred_element_type=jnp.float32,
    ).astype(scores_ref.dtype)


@functools.partial(
    jax.jit, static_argnames=("n_users", "tb", "tn", "compute_dtype")
)
def basic_model_forward_factored(
    rep, users, *, n_users, tb=256, tn=1024, compute_dtype=None
):
    """Scoring hot path.

    Returns (scores, user_sq, item_sq):
      scores  : (B, N) f32   = users_r @ items_r.T     (Pallas kernel)
      user_sq : (B,)   f32   = ||users_r||^2           (wrapper, always f32)
      item_sq : (N,)   f32   = ||items_r||^2           (wrapper, always f32)

    The dense (B, N) l2 matrix of the PyTorch module is the rank-1 sum
    user_sq[:, None] + item_sq[None, :]; keeping it factored avoids a second
    dense HBM write.  compute_dtype (e.g. jnp.bfloat16 on v6e/v7x) only
    affects the matmul inputs; accumulation and norms stay f32.
    """
    users_r = rep[users, :]          # (B, D)   gather -- glue, plain JAX
    items_r = rep[n_users:, :]       # (N, D)   slice  -- glue, plain JAX
    B, D = users_r.shape
    N = items_r.shape[0]

    # Squared L2 norms, always from the f32 embeddings (exact, rank-1 factors).
    users_f32 = users_r.astype(jnp.float32)
    items_f32 = items_r.astype(jnp.float32)
    user_sq = jnp.sum(users_f32 * users_f32, axis=1)     # (B,)
    item_sq = jnp.sum(items_f32 * items_f32, axis=1)     # (N,)

    if compute_dtype is not None:
        # e.g. bf16 on v6e/v7x: halves the streamed item bytes, MXU runs at
        # its bf16 rate; accumulation stays f32 via preferred_element_type.
        users_r = users_r.astype(compute_dtype)
        items_r = items_r.astype(compute_dtype)

    itemsize = jnp.dtype(users_r.dtype).itemsize
    # Sublane granularity: 8 rows for 32-bit, 16 for bf16, 32 for 8-bit.
    sub = max(8, 32 // itemsize)

    # Tile sizes: clamp to the (padded) problem; respect the (8, 128) rule.
    tb = min(tb, _round_up(B, sub))
    tn = min(tn, _round_up(N, 128))
    Bp = _round_up(B, tb)
    Np = _round_up(N, tn)

    if Bp != B:
        users_r = jnp.pad(users_r, ((0, Bp - B), (0, 0)))

    transpose_items = D < 128
    if transpose_items:
        # Lane-dense (D, N) item operand for small embedding dims.
        items_in = items_r.T                                  # (D, N)
        if Np != N:
            items_in = jnp.pad(items_in, ((0, 0), (0, Np - N)))
        item_spec = pl.BlockSpec((D, tn), lambda j, i: (0, j))
        kernel = _score_kernel_items_t
        item_tile_elems = D * tn
    else:
        items_in = items_r                                    # (N, D)
        if Np != N:
            items_in = jnp.pad(items_in, ((0, Np - N), (0, 0)))
        item_spec = pl.BlockSpec((tn, D), lambda j, i: (j, 0))
        kernel = _score_kernel_items_nt
        item_tile_elems = tn * D

    # Item-tile axis OUTERMOST, user-tile axis innermost: the big item table
    # streams once; only the small user tile restreams per item tile.
    grid = (Np // tn, Bp // tb)

    # Explicit VMEM budget (double-buffered in/out tiles + headroom).
    working_set = 2 * (tb * tn * 4 + (tb * D + item_tile_elems) * itemsize)
    vmem_limit = int(min(64 << 20, max(32 << 20, 2 * working_set)))

    scores_p = pl.pallas_call(
        kernel,
        out_shape=jax.ShapeDtypeStruct((Bp, Np), jnp.float32),
        grid=grid,
        in_specs=[
            pl.BlockSpec((tb, D), lambda j, i: (i, 0)),   # user tile (fast axis)
            item_spec,                                    # item tile (slow axis, stays resident)
        ],
        out_specs=pl.BlockSpec((tb, tn), lambda j, i: (i, j)),
        compiler_params=pltpu.CompilerParams(
            dimension_semantics=("parallel", "parallel"),
            vmem_limit_bytes=vmem_limit,
        ),
    )(users_r, items_in)

    return scores_p[:B, :N], user_sq, item_sq


@functools.partial(
    jax.jit, static_argnames=("n_users", "tb", "tn", "compute_dtype")
)
def basic_model_forward(rep, users, *, n_users, tb=256, tn=1024, compute_dtype=None):
    """Mirrors BasicModel.forward: returns (scores, l2_norm_sq), both (B, N).

    The dense l2 matrix is a rank-1 broadcast-add built OUTSIDE the kernel;
    prefer basic_model_forward_factored if the caller can consume the
    factored norms.
    """
    scores, user_sq, item_sq = basic_model_forward_factored(
        rep, users, n_users=n_users, tb=tb, tn=tn, compute_dtype=compute_dtype
    )
    l2_norm_sq = user_sq[:, None] + item_sq[None, :]
    return scores, l2_norm_sq


def _reference_forward(rep, users, n_users):
    users_r = rep[users, :]
    items_r = rep[n_users:, :]
    scores = users_r @ items_r.T
    l2 = jnp.sum(users_r**2, axis=1)[:, None] + jnp.sum(items_r**2, axis=1)[None, :]
    return scores, l2


if __name__ == "__main__":
    # Synthetic "dataset": n_users entities + n_items entities, embedding dim D.
    n_users, n_items, D = 16, 128, 32
    batch = 8

    key = jax.random.PRNGKey(0)
    k_emb, k_usr = jax.random.split(key)

    # initial_embeddings(): normal_(std=0.1) over the embedding table.
    rep = 0.1 * jax.random.normal(k_emb, (n_users + n_items, D), dtype=jnp.float32)
    users = jax.random.randint(k_usr, (batch,), 0, n_users, dtype=jnp.int32)

    ref_scores, ref_l2 = _reference_forward(rep, users, n_users)

    # --- f32 path: exact parity with the reference ---
    scores, l2_norm_sq = basic_model_forward(rep, users, n_users=n_users)
    scores = jax.block_until_ready(scores)
    l2_norm_sq = jax.block_until_ready(l2_norm_sq)

    assert scores.shape == (batch, n_items)
    assert l2_norm_sq.shape == (batch, n_items)
    assert jnp.allclose(scores, ref_scores, atol=1e-5, rtol=1e-5)
    assert jnp.allclose(l2_norm_sq, ref_l2, atol=1e-5, rtol=1e-5)

    # --- bf16 matmul inputs (recommended default on v6e/v7x); l2 stays exact f32 ---
    scores_bf16, l2_bf16 = basic_model_forward(
        rep, users, n_users=n_users, compute_dtype=jnp.bfloat16
    )
    scores_bf16 = jax.block_until_ready(scores_bf16)
    l2_bf16 = jax.block_until_ready(l2_bf16)

    assert scores_bf16.shape == (batch, n_items)
    assert jnp.allclose(scores_bf16, ref_scores, atol=1e-2, rtol=5e-2)
    assert jnp.allclose(l2_bf16, ref_l2, atol=1e-5, rtol=1e-5)  # norms always f32

    print("KERNEL_OK")
</pallas_src>

<mosaic_0001>
module attributes {stable_mosaic.version = 11 : i64} {
  func.func @_score_kernel_items_t(%arg0: i32, %arg1: i32, %arg2: memref<8x32xf32, #tpu.memory_space<vmem>>, %arg3: memref<32x128xf32, #tpu.memory_space<vmem>>, %arg4: memref<8x128xf32, #tpu.memory_space<vmem>>) attributes {dimension_semantics = [#tpu.dimension_semantics<parallel>, #tpu.dimension_semantics<parallel>], iteration_bounds = array<i64: 1, 1>, scalar_prefetch = 0 : i64, scratch_operands = 0 : i64, tpu.core_type = #tpu.core_type<tc>, window_params = [{transform_indices = @transform_0, window_bounds = array<i64: 8, 32>}, {transform_indices = @transform_1, window_bounds = array<i64: 32, 128>}, {transform_indices = @transform_2, window_bounds = array<i64: 8, 128>}]} {
    %c0 = arith.constant 0 : index
    %c0_0 = arith.constant 0 : index
    %0 = vector.load %arg2[%c0, %c0_0] : memref<8x32xf32, #tpu.memory_space<vmem>>, vector<8x32xf32>
    %c0_1 = arith.constant 0 : index
    %c0_2 = arith.constant 0 : index
    %1 = vector.load %arg3[%c0_1, %c0_2] : memref<32x128xf32, #tpu.memory_space<vmem>>, vector<32x128xf32>
    %cst = arith.constant dense<0.000000e+00> : vector<8x128xf32>
    %2 = tpu.matmul %0, %1, %cst {dimension_numbers = #tpu.dot_dimension_numbers<[1], [0], [0], [1], [0, 0, 1, 1], [], []>} : vector<8x32xf32>, vector<32x128xf32>, vector<8x128xf32> -> vector<8x128xf32>
    %c0_3 = arith.constant 0 : index
    %c0_4 = arith.constant 0 : index
    %3 = vector.load %arg4[%c0_3, %c0_4] : memref<8x128xf32, #tpu.memory_space<vmem>>, vector<8x128xf32>
    tpu.vector_store %arg4[%c0_3, %c0_4], %2 {strides = array<i32>} : memref<8x128xf32, #tpu.memory_space<vmem>>, vector<8x128xf32>,
    return
  }
  func.func @transform_0(%arg0: i32, %arg1: i32) -> (i32, i32) {
    %c0_i32 = arith.constant 0 : i32
    %c0_i32_0 = arith.constant 0 : i32
    return %arg1, %c0_i32 : i32, i32
  }
  func.func @transform_1(%arg0: i32, %arg1: i32) -> (i32, i32) {
    %c0_i32 = arith.constant 0 : i32
    %c0_i32_0 = arith.constant 0 : i32
    return %c0_i32, %arg0 : i32, i32
  }
  func.func @transform_2(%arg0: i32, %arg1: i32) -> (i32, i32) {
    %c0_i32 = arith.constant 0 : i32
    return %arg1, %arg0 : i32, i32
  }
}

</mosaic_0001>

<llo_original>
// kernel: basic_model_forward_factored.1
$region0: #{basic_model_forward_factored.1}
  #allocation0 [shape = 'u32[]', space=smem, size = 0x4, offset = 0x4, fixed_abs, tag = 'smem constant byte address 0x4 - core index']
  #allocation1 [shape = 'u32[144,128]{1,0:T(1,128)}', space=vmem, size = 0x12000, scoped, tag = 'internal scratch']
  %s0 = inlined_call_operand.vmem [shape: f32[8,32], index: 0, kind: input, shape index: {}]
  %s1 = inlined_call_operand.vmem [shape: f32[32,128], index: 1, kind: input, shape index: {}]
  %s2 = inlined_call_operand.hbm [shape: f32[8,128], index: 2, kind: output, shape index: {}]
  %s3 = sld [smem:[#allocation0]]
  $region18: #{basic_model_forward_factored.1} parent=0
    _
  %s5 = ssub.s32 1, %s3
  %s6 = scalar_select 0, %s5, %s3
  $region1: #{basic_model_forward_factored.1} parent=0
    #allocation2 [shape = 'u8[4096]{0}', space=vmem, size = 0x1000, scoped, tag = 'output window, operand 0, single buffered']
    #allocation3 [shape = 's32[1]{0}', space=sflag, size = 0x4, scoped, tag = 'scoped memory for basic_model_forward_factored.1']
    %7 = vsyncpa [#allocation3], 0
    // Predicated region
    $region2: #{basic_model_forward_factored.1} parent=1 // pred_check
      _
    $region3: #{basic_model_forward_factored.1} parent=1 // pred_check_branch
      %9 = sbr.rel (0) target = $region5
    $region4: #{basic_model_forward_factored.1} parent=1 // pred_region
      _
    $region5: #{basic_model_forward_factored.1} parent=1 // pred_fallthru
      _
    // Predicated region
    $region6: #{basic_model_forward_factored.1} parent=1 // pred_check
      _
    $region7: #{basic_model_forward_factored.1} parent=1 // pred_check_branch
      %11 = sbr.rel (0) target = $region9
    $region8: #{basic_model_forward_factored.1} parent=1 // pred_region
      _
    $region9: #{basic_model_forward_factored.1} parent=1 // pred_fallthru
      _
    %v12 = vld [vmem:[%s0] sm:$0xff]
    %v13 = vld [vmem:[%s1] sm:$0xff]
    %v14 = vld [vmem:[%s1 + $0x8] sm:$0xff]
    %v15 = vld [vmem:[%s1 + $0x10] sm:$0xff]
    %v16 = vld [vmem:[%s1 + $0x18] sm:$0xff]
    %vm17 = vcmask 261120
    %v19 = vsel %vm17, %v12, 0
    %21 = vmatprep.subr.mxu0 0.0
    %22 = vmatpush1.msra.mxu0 %v13
    %23 = vmatprep.subr.mxu0 0.0
    %24 = vmatpush1.msra.mxu0 %v14
    %25 = vmatprep.subr.mxu0 0.0
    %26 = vmatpush1.msra.mxu0 %v15
    %27 = vmatprep.subr.mxu0 0.0
    %28 = vmatpush1.msra.mxu0 %v16
    %29 = vmatprep.subr.mxu0 0.0
    %30 = vmatpush1.msra.mxu0 0.0
    %31 = vmatprep.subr.mxu0 0.0
    %32 = vmatpush1.msra.mxu0 0.0
    %33 = vmatprep.subr.mxu0 0.0
    %34 = vmatpush1.msra.mxu0 0.0
    %35 = vmatprep.subr.mxu0 0.0
    %36 = vmatpush1.msra.mxu0 0.0
    %37 = vmatprep.subr.mxu0 0.0
    %38 = vmatpush1.msra.mxu0 0.0
    %39 = vmatprep.subr.mxu0 0.0
    %40 = vmatpush1.msra.mxu0 0.0
    %41 = vmatprep.subr.mxu0 0.0
    %42 = vmatpush1.msra.mxu0 0.0
    %43 = vmatprep.subr.mxu0 0.0
    %44 = vmatpush1.msra.mxu0 0.0
    %45 = vmatprep.subr.mxu0 0.0
    %46 = vmatpush1.msra.mxu0 0.0
    %47 = vmatprep.subr.mxu0 0.0
    %48 = vmatpush1.msra.mxu0 0.0
    %49 = vmatprep.subr.mxu0 0.0
    %50 = vmatpush1.msra.mxu0 0.0
    %51 = vmatprep.subr.mxu0 0.0
    %52 = vmatpush1.msra.mxu0 0.0
    %53 = vmatprep.subr.mxu0 0.0
    %54 = vmatpush1.msra.mxu0 0.0
    %55 = vmatprep.subr.mxu0 0.0
    %56 = vmatpush1.msra.mxu0 0.0
    %57 = vmatprep.subr.mxu0 0.0
    %58 = vmatpush1.msra.mxu0 0.0
    %59 = vmatprep.subr.mxu0 0.0
    %60 = vmatpush1.msra.mxu0 0.0
    %61 = vmatprep.subr.mxu0 0.0
    %62 = vmatpush1.msra.mxu0 0.0
    %63 = vmatprep.subr.mxu0 0.0
    %64 = vmatpush1.msra.mxu0 0.0
    %65 = vmatprep.subr.mxu0 0.0
    %66 = vmatpush1.msra.mxu0 0.0
    %67 = vmatprep.subr.mxu0 0.0
    %68 = vmatpush1.msra.mxu0 0.0
    %69 = vmatprep.subr.mxu0 0.0
    %70 = vmatpush1.msra.mxu0 0.0
    %71 = vmatprep.subr.mxu0 0.0
    %72 = vmatpush1.msra.mxu0 0.0
    %73 = vmatprep.subr.mxu0 0.0
    %74 = vmatpush1.msra.mxu0 0.0
    %75 = vmatprep.subr.mxu0 0.0
    %76 = vmatpush1.msra.mxu0 0.0
    %77 = vmatprep.subr.mxu0 0.0
    %78 = vmatpush1.msra.mxu0 0.0
    %79 = vmatprep.subr.mxu0 0.0
    %80 = vmatpush1.msra.mxu0 0.0
    %81 = vmatprep.subr.mxu0 0.0
    %82 = vmatpush1.msra.mxu0 0.0
    %83 = vmatprep.subr.mxu0 0.0
    %84 = vmatpush1.msra.mxu0 0.0
    %85 = vmatprep.mubr.f32.mxu0 0.0
    %86 = vmatmul.mubr.f32.gmra.mrb[0].mxu0 %v19
    %v87 = vpop.f32.mrb[0].mxu0
    %v88 = vadd.f32 0.0, %v87
    %v89 = vpop.f32.mrb[0].mxu0
    %90 = vdwg.mxu0
    %91 = vst [vmem:[#allocation2] sm:$0xff] %v88
    // Predicated region
    $region10: #{basic_model_forward_factored.1} parent=1 // pred_check
      _
    $region11: #{basic_model_forward_factored.1} parent=1 // pred_check_branch
      %93 = sbr.rel (0) target = $region13
    $region12: #{basic_model_forward_factored.1} parent=1 // pred_region
      %s95 = ssub.s32 128, 128
      %96 = vsyncadd [#allocation3], %s95
      %s98 = sshll.u32 [#allocation2], 4
      %s99 = int_to_ptr.vmem [resolvable:$true] %s98
      %101 = dma.vmem_to_hbm [thread:$0]  %s99, 128, %s2, [#allocation3]
    $region13: #{basic_model_forward_factored.1} parent=1 // pred_fallthru
      _
    // Predicated region
    $region14: #{basic_model_forward_factored.1} parent=1 // pred_check
      _
    $region15: #{basic_model_forward_factored.1} parent=1 // pred_check_branch
      %103 = sbr.rel (0) target = $region17
    $region16: #{basic_model_forward_factored.1} parent=1 // pred_region
      %104 = dma.done [#allocation3], 128
    $region17: #{basic_model_forward_factored.1} parent=1 // pred_fallthru
      _
    %105 = vsyncpa [#allocation3], 1

</llo_original>
